<compile_context>
chip_gen: v5e
topology: v5e:2x2
jax: 0.10.0
libtpu: 0.0.40
codegen_flags: <defaults>
</compile_context>

<pallas_src>
import jax
import jax.numpy as jnp
from jax.experimental import pallas as pl
from jax.experimental.pallas import tpu as pltpu


def spatial_embedding_kernel(zf_ref, emb_ref, out_ref, pos_ref):
    # zf_ref : [T, BB]    f32  masked z (+inf where unused), batch on LANES
    # emb_ref: [T, D]          embedding rows for token slots 0..T-1
    # out_ref: [BB, T, D]      gathered embeddings (lane-dense for D >= 128)
    # pos_ref: [T, BB]    i32  sorted_pos, transposed (batch on lanes)
    T, BB = zf_ref.shape
    D = emb_ref.shape[1]

    zf = zf_ref[...]                                             # [T, BB]

    # --- stable ascending rank, batch dense on lanes -------------------------
    # before[i, j, b] = 1 iff token i precedes token j in graph b:
    #   z[i] < z[j], or z[i] == z[j] and i < j  (stable tie-break).
    zi = zf[:, None, :]                                          # [T_i, 1, BB]
    zj = zf[None, :, :]                                          # [1, T_j, BB]
    ii = jax.lax.broadcasted_iota(jnp.int32, (T, T, BB), 0)
    jj = jax.lax.broadcasted_iota(jnp.int32, (T, T, BB), 1)
    before = (zi < zj) | ((zi == zj) & (ii < jj))                # [T_i, T_j, BB]
    # Leading-axis reduce -> plain VALU adds of dense [T_j, BB] vregs (no XLU).
    rank = jnp.sum(before.astype(jnp.int32), axis=0)             # [T_j, BB]

    # --- sorted_pos[r, b] = token j whose rank is r (inverse permutation) ----
    # One-hot in [T_j, T_r, BB] layout so the j-reduce is again leading-axis
    # and the result lands directly in the lane-dense [T_r, BB] output layout.
    rr = jax.lax.broadcasted_iota(jnp.int32, (T, T, BB), 1)      # r on axis 1
    jj0 = jax.lax.broadcasted_iota(jnp.int32, (T, T, BB), 0)     # j on axis 0
    oh_pos = rank[:, None, :] == rr                              # [T_j, T_r, BB]
    pos_ref[...] = jnp.sum(jnp.where(oh_pos, jj0, 0), axis=0)    # [T_r, BB] i32

    # --- embedding gather: one MXU matmul, lane-dense [BB, T, D] output ------
    # The MXU LHS wants batch on sublanes, so pivot rank once (a single
    # [T, BB] vreg transpose, exact as f32 since rank < T <= 64) and build
    #   onehot[b*T + r, j] = (rank[j, b] == r).
    rank_bj = rank.astype(jnp.float32).T                         # [BB, T_j]
    r_idx = jax.lax.broadcasted_iota(jnp.int32, (BB, T, T), 1).astype(jnp.float32)
    onehot = rank_bj[:, None, :] == r_idx                        # [BB, T_r, T_j]
    # Reshapes below only merge/split leading dims -> layout-preserving.
    lhs = onehot.reshape(BB * T, T).astype(emb_ref.dtype)        # [BB*T, T]
    gathered = jnp.dot(lhs, emb_ref[...],
                       preferred_element_type=jnp.float32)       # [BB*T, D] f32 acc
    out_ref[...] = gathered.reshape(BB, T, D).astype(out_ref.dtype)


def spatial_embedding(x, pos_clone, emb_weight, *, blk_b=128, min_grid_steps=1):
    """Pallas SpatialEmbedding forward.

    Args:
      x:          [B, T, F] int; x[:, :, 0] == 0 marks a used token slot.
      pos_clone:  [B, T, 3] float; the last channel is the z coordinate.
      emb_weight: [V, D] embedding table (V >= T).  Its dtype selects the MXU
                  matmul dtype (bf16 table -> native bf16 matmul, f32 accum).
      blk_b:      graphs per grid step.  128 suits v5e (128-row MXU); use 256
                  on v6e to fill the 256-row MXU.  Must be a multiple of 128
                  when more than one grid step is used (lane-dense zf / pos
                  blocks); small batches collapse to a single step.
      min_grid_steps: set to 2 on v7x so dimension_semantics=("parallel",)
                  shards the grid across both TensorCores; leave at 1 on
                  v5e/v6e (single TC) -- extra steps only add ~0.35us each.
    Returns:
      (embeddings [B, T, D] in emb_weight.dtype, sorted_pos [B, T] int32).
    """
    B, T = x.shape[:2]
    D = emb_weight.shape[1]
    out_dtype = emb_weight.dtype

    # Fuse mask + z extraction into one input and transpose so the BATCH sits
    # on lanes inside the kernel (one small DMA per step).
    z = pos_clone[:, :, -1].astype(jnp.float32)
    zf_t = jnp.where(x[:, :, 0] == 0, z, jnp.inf).T              # [T, B]

    # Only rows < T of the table can ever be gathered (indices are token slots).
    emb = emb_weight[:T]                                         # [T, D]

    if B <= blk_b and min_grid_steps <= 1:
        BB = Bp = B                                              # single grid step
    else:
        BB = max(128, (blk_b // 128) * 128)                      # lane-dense blocks
        Bp = max(min_grid_steps, pl.cdiv(B, BB)) * BB
    if Bp > B:
        # Padded graphs are all-+inf -> identity permutation; sliced off below.
        zf_t = jnp.pad(zf_t, ((0, 0), (0, Bp - B)), constant_values=jnp.inf)

    out_p, pos_t = pl.pallas_call(
        spatial_embedding_kernel,
        out_shape=(
            jax.ShapeDtypeStruct((Bp, T, D), out_dtype),
            jax.ShapeDtypeStruct((T, Bp), jnp.int32),
        ),
        grid_spec=pltpu.PrefetchScalarGridSpec(
            num_scalar_prefetch=0,
            grid=(Bp // BB,),
            in_specs=[
                pl.BlockSpec((T, BB), lambda b: (0, b)),       # zf, batch on lanes
                # Grid-invariant table block: <= 0.25 MiB even at production
                # sizes (T=64, D=1024, f32), so the default double-buffering is
                # negligible and no pl.Buffered(1) override is needed.
                pl.BlockSpec((T, D), lambda b: (0, 0)),
            ],
            out_specs=[
                pl.BlockSpec((BB, T, D), lambda b: (b, 0, 0)),  # lane-dense embeddings
                pl.BlockSpec((T, BB), lambda b: (0, b)),        # lane-dense sorted_pos
            ],
        ),
        compiler_params=pltpu.CompilerParams(dimension_semantics=("parallel",)),
    )(zf_t, emb)

    return out_p[:B], pos_t[:, :B].T                             # [B,T,D], [B,T]


def spatial_embedding_reference(x, pos_clone, emb_weight):
    z = pos_clone[:, :, -1]
    zf = jnp.where(x[:, :, 0] == 0, z, jnp.inf)
    sorted_pos = jnp.argsort(zf, axis=-1).astype(jnp.int32)      # stable argsort
    return emb_weight[sorted_pos], sorted_pos


if __name__ == "__main__":
    B, T, F = 2, 8, 3            # n_graphs, n_tokens, token features
    D = 128                      # embed_dim (small; real module uses 1024)
    MAX_NUM_TOKENS = 64

    key = jax.random.PRNGKey(0)
    k_emb, k_pos, k_pos2 = jax.random.split(key, 3)

    # Deterministic "parameters": nn.Embedding(max_num_tokens, embed_dim) weight.
    emb_weight = 0.02 * jax.random.normal(k_emb, (MAX_NUM_TOKENS, D), jnp.float32)

    # Deterministic inputs; x[:, :, 0] == 0 marks a used token slot.
    lengths = jnp.array([6, 5], dtype=jnp.int32)
    tok = jnp.arange(T, dtype=jnp.int32)
    x0 = jnp.where(tok[None, :] < lengths[:, None], 0, 1)                  # [B, T]
    x = jnp.stack([x0, jnp.broadcast_to(tok, (B, T)),
                   jnp.ones((B, T), jnp.int32)], axis=-1)                  # [B, T, 3]
    pos_clone = jax.random.normal(k_pos, (B, T, 3), jnp.float32)

    out, sorted_pos = spatial_embedding(x, pos_clone, emb_weight)
    jax.block_until_ready((out, sorted_pos))

    ref_out, ref_pos = spatial_embedding_reference(x, pos_clone, emb_weight)
    assert out.shape == (B, T, D) and sorted_pos.shape == (B, T)
    assert bool(jnp.all(sorted_pos == ref_pos)), "sorted_pos mismatch"
    assert bool(jnp.allclose(out, ref_out, atol=1e-6)), "embedding output mismatch"

    # Multi-block path: 2 parallel grid steps (what min_grid_steps=2 buys on
    # v7x) plus batch padding to a multiple of the 128-graph block.
    B2 = 160
    lengths2 = (jnp.arange(B2, dtype=jnp.int32) % T) + 1
    x0_2 = jnp.where(tok[None, :] < lengths2[:, None], 0, 1)
    x2 = jnp.stack([x0_2, jnp.broadcast_to(tok, (B2, T)),
                    jnp.ones((B2, T), jnp.int32)], axis=-1)
    pos_clone2 = jax.random.normal(k_pos2, (B2, T, 3), jnp.float32)

    out2, pos2 = spatial_embedding(x2, pos_clone2, emb_weight, blk_b=128)
    jax.block_until_ready((out2, pos2))
    ref_out2, ref_pos2 = spatial_embedding_reference(x2, pos_clone2, emb_weight)
    assert bool(jnp.all(pos2 == ref_pos2)), "sorted_pos mismatch (multi-block)"
    assert bool(jnp.allclose(out2, ref_out2, atol=1e-6)), "embedding mismatch (multi-block)"

    print("KERNEL_OK")
</pallas_src>

<mosaic_0001>
module attributes {stable_mosaic.version = 11 : i64} {
  func.func @spatial_embedding_kernel(%arg0: i32, %arg1: memref<8x2xf32, #tpu.memory_space<vmem>>, %arg2: memref<8x128xf32, #tpu.memory_space<vmem>>, %arg3: memref<2x8x128xf32, #tpu.memory_space<vmem>>, %arg4: memref<8x2xi32, #tpu.memory_space<vmem>>) attributes {dimension_semantics = [#tpu.dimension_semantics<parallel>], iteration_bounds = array<i64: 1>, scalar_prefetch = 0 : i64, scratch_operands = 0 : i64, tpu.core_type = #tpu.core_type<tc>, window_params = [{transform_indices = @transform_0, window_bounds = array<i64: 8, 2>}, {pipeline_mode = #tpu.pipeline_mode<synchronous>, transform_indices = @transform_1, window_bounds = array<i64: 8, 128>}, {transform_indices = @transform_2, window_bounds = array<i64: 2, 8, 128>}, {transform_indices = @transform_3, window_bounds = array<i64: 8, 2>}]} {
    %c0 = arith.constant 0 : index
    %c0_0 = arith.constant 0 : index
    %0 = vector.load %arg1[%c0, %c0_0] : memref<8x2xf32, #tpu.memory_space<vmem>>, vector<8x2xf32>
    %1 = vector.shape_cast %0 : vector<8x2xf32> to vector<8x1x2xf32>
    %2 = vector.shape_cast %0 : vector<8x2xf32> to vector<1x8x2xf32>
    %3 = tpu.iota {dimensions = array<i32: 0>} : vector<8x8x2xi32>
    %4 = tpu.iota {dimensions = array<i32: 1>} : vector<8x8x2xi32>
    %5 = vector.broadcast %1 : vector<8x1x2xf32> to vector<8x8x2xf32>
    %6 = vector.broadcast %2 : vector<1x8x2xf32> to vector<8x8x2xf32>
    %7 = arith.cmpf olt, %5, %6 : vector<8x8x2xf32>
    %8 = vector.broadcast %1 : vector<8x1x2xf32> to vector<8x8x2xf32>
    %9 = vector.broadcast %2 : vector<1x8x2xf32> to vector<8x8x2xf32>
    %10 = arith.cmpf oeq, %8, %9 : vector<8x8x2xf32>
    %11 = arith.cmpi slt, %3, %4 : vector<8x8x2xi32>
    %12 = arith.andi %10, %11 : vector<8x8x2xi1>
    %13 = arith.ori %7, %12 : vector<8x8x2xi1>
    %14 = arith.extui %13 : vector<8x8x2xi1> to vector<8x8x2xi32>
    %cst = arith.constant dense<0> : vector<8x2xi32>
    %15 = vector.multi_reduction <add>, %14, %cst [0] : vector<8x8x2xi32> to vector<8x2xi32>
    %16 = tpu.iota {dimensions = array<i32: 1>} : vector<8x8x2xi32>
    %17 = tpu.iota {dimensions = array<i32: 0>} : vector<8x8x2xi32>
    %18 = vector.shape_cast %15 : vector<8x2xi32> to vector<8x1x2xi32>
    %19 = vector.broadcast %18 : vector<8x1x2xi32> to vector<8x8x2xi32>
    %20 = arith.cmpi eq, %19, %16 : vector<8x8x2xi32>
    %c0_i32 = arith.constant 0 : i32
    %21 = vector.broadcast %c0_i32 : i32 to vector<8x8x2xi32>
    %22 = arith.select %20, %17, %21 : vector<8x8x2xi1>, vector<8x8x2xi32>
    %cst_1 = arith.constant dense<0> : vector<8x2xi32>
    %23 = vector.multi_reduction <add>, %22, %cst_1 [0] : vector<8x8x2xi32> to vector<8x2xi32>
    %c0_2 = arith.constant 0 : index
    %c0_3 = arith.constant 0 : index
    %24 = vector.load %arg4[%c0_2, %c0_3] : memref<8x2xi32, #tpu.memory_space<vmem>>, vector<8x2xi32>
    tpu.vector_store %arg4[%c0_2, %c0_3], %23 {strides = array<i32>} : memref<8x2xi32, #tpu.memory_space<vmem>>, vector<8x2xi32>,
    %25 = arith.sitofp %15 : vector<8x2xi32> to vector<8x2xf32>
    %26 = tpu.transpose %25, [1, 0] : vector<8x2xf32> -> vector<2x8xf32>
    %27 = tpu.iota {dimensions = array<i32: 1>} : vector<2x8x8xi32>
    %28 = arith.sitofp %27 : vector<2x8x8xi32> to vector<2x8x8xf32>
    %29 = vector.shape_cast %26 : vector<2x8xf32> to vector<2x1x8xf32>
    %30 = vector.broadcast %29 : vector<2x1x8xf32> to vector<2x8x8xf32>
    %31 = arith.cmpf oeq, %30, %28 : vector<2x8x8xf32>
    %32 = vector.shape_cast %31 : vector<2x8x8xi1> to vector<16x8xi1>
    %33 = arith.extui %32 : vector<16x8xi1> to vector<16x8xi32>
    %34 = arith.sitofp %33 : vector<16x8xi32> to vector<16x8xf32>
    %c0_4 = arith.constant 0 : index
    %c0_5 = arith.constant 0 : index
    %35 = vector.load %arg2[%c0_4, %c0_5] : memref<8x128xf32, #tpu.memory_space<vmem>>, vector<8x128xf32>
    %cst_6 = arith.constant dense<0.000000e+00> : vector<16x128xf32>
    %36 = tpu.matmul %34, %35, %cst_6 {dimension_numbers = #tpu.dot_dimension_numbers<[1], [0], [0], [1], [0, 0, 1, 1], [], []>} : vector<16x8xf32>, vector<8x128xf32>, vector<16x128xf32> -> vector<16x128xf32>
    %37 = vector.shape_cast %36 : vector<16x128xf32> to vector<2x8x128xf32>
    %c0_7 = arith.constant 0 : index
    %c0_8 = arith.constant 0 : index
    %c0_9 = arith.constant 0 : index
    %38 = vector.load %arg3[%c0_7, %c0_8, %c0_9] : memref<2x8x128xf32, #tpu.memory_space<vmem>>, vector<2x8x128xf32>
    tpu.vector_store %arg3[%c0_7, %c0_8, %c0_9], %37 {strides = array<i32>} : memref<2x8x128xf32, #tpu.memory_space<vmem>>, vector<2x8x128xf32>,
    return
  }
  func.func @transform_0(%arg0: i32) -> (i32, i32) {
    %c0_i32 = arith.constant 0 : i32
    %c0_i32_0 = arith.constant 0 : i32
    return %c0_i32, %arg0 : i32, i32
  }
  func.func @transform_1(%arg0: i32) -> (i32, i32) {
    %c0_i32 = arith.constant 0 : i32
    %c0_i32_0 = arith.constant 0 : i32
    %c0_i32_1 = arith.constant 0 : i32
    return %c0_i32, %c0_i32_0 : i32, i32
  }
  func.func @transform_2(%arg0: i32) -> (i32, i32, i32) {
    %c0_i32 = arith.constant 0 : i32
    %c0_i32_0 = arith.constant 0 : i32
    %c0_i32_1 = arith.constant 0 : i32
    return %arg0, %c0_i32, %c0_i32_0 : i32, i32, i32
  }
  func.func @transform_3(%arg0: i32) -> (i32, i32) {
    %c0_i32 = arith.constant 0 : i32
    %c0_i32_0 = arith.constant 0 : i32
    return %c0_i32, %arg0 : i32, i32
  }
}

</mosaic_0001>

<llo_original>
// kernel: tpu_custom_call.1
$region0: #{tpu_custom_call.1}
  #allocation0 [shape = 'u32[]', space=smem, size = 0x4, offset = 0x4, fixed_abs, tag = 'smem constant byte address 0x4 - core index']
  #allocation1 [shape = 'u32[72,128]{1,0:T(1,128)}', space=vmem, size = 0x9000, scoped, tag = 'internal scratch']
  %s0 = inlined_call_operand.vmem [shape: f32[8,2], index: 0, kind: input, shape index: {}]
  %s1 = inlined_call_operand.vmem [shape: f32[8,128], index: 1, kind: input, shape index: {}]
  %s2 = inlined_call_operand.hbm [shape: f32[2,8,128], index: 2, kind: output, shape index: {0}]
  %s3 = inlined_call_operand.vmem [shape: s32[8,2], index: 3, kind: output, shape index: {1}]
  %4 = xla_tuple %s2, %s3
  %s5 = sld [smem:[#allocation0]]
  $region26: #{tpu_custom_call.1} parent=0
    _
  %s7 = ssub.s32 1, %s5
  %s8 = scalar_select 0, %s7, %s5
  $region1: #{tpu_custom_call.1} parent=0
    #allocation2 [shape = 'u8[8192]{0}', space=vmem, size = 0x2000, scoped, tag = 'output window, operand 0, single buffered']
    #allocation3 [shape = 's32[1]{0}', space=sflag, size = 0x4, scoped, tag = 'scoped memory for tpu_custom_call.1']
    %9 = vsyncpa [#allocation3], 0
    // Predicated region
    $region2: #{tpu_custom_call.1} parent=1 // pred_check
      _
    $region3: #{tpu_custom_call.1} parent=1 // pred_check_branch
      %11 = sbr.rel (0) target = $region5
    $region4: #{tpu_custom_call.1} parent=1 // pred_region
      _
    $region5: #{tpu_custom_call.1} parent=1 // pred_fallthru
      _
    // Predicated region
    $region6: #{tpu_custom_call.1} parent=1 // pred_check
      _
    $region7: #{tpu_custom_call.1} parent=1 // pred_check_branch
      %13 = sbr.rel (0) target = $region9
    $region8: #{tpu_custom_call.1} parent=1 // pred_region
      _
    $region9: #{tpu_custom_call.1} parent=1 // pred_fallthru
      _
    %v14 = vld [vmem:[%s0] sm:$0xff]
    %v16 = vrot.slane %v14, 1
    %v17 = vrot.slane %v14, 2
    %v18 = vrot.slane %v14, 3
    %v19 = vrot.slane %v14, 4
    %v20 = vrot.slane %v14, 5
    %v21 = vrot.slane %v14, 6
    %v22 = vrot.slane %v14, 7
    %v23 = vlaneseq
    %v24 = vshrl.u32 %v23, 7
    %v25 = vperm.slane %v14, 0
    %v26 = vperm.slane %v16, 0
    %v27 = vperm.slane %v17, 0
    %v28 = vperm.slane %v18, 0
    %v29 = vperm.slane %v19, 0
    %v30 = vperm.slane %v20, 0
    %v31 = vperm.slane %v21, 0
    %v32 = vperm.slane %v22, 0
    %vm41 = vcmp.lt.f32.partialorder %v25, %v14
    %vm42 = vcmp.lt.f32.partialorder %v26, %v14
    %vm43 = vcmp.lt.f32.partialorder %v27, %v14
    %vm44 = vcmp.lt.f32.partialorder %v28, %v14
    %vm45 = vcmp.lt.f32.partialorder %v29, %v14
    %vm46 = vcmp.lt.f32.partialorder %v30, %v14
    %vm47 = vcmp.lt.f32.partialorder %v31, %v14
    %vm48 = vcmp.lt.f32.partialorder %v32, %v14
    %vm49 = vcmp.eq.f32.partialorder %v25, %v14
    %vm50 = vcmp.eq.f32.partialorder %v26, %v14
    %vm51 = vcmp.eq.f32.partialorder %v27, %v14
    %vm52 = vcmp.eq.f32.partialorder %v28, %v14
    %vm53 = vcmp.eq.f32.partialorder %v29, %v14
    %vm54 = vcmp.eq.f32.partialorder %v30, %v14
    %vm55 = vcmp.eq.f32.partialorder %v31, %v14
    %vm56 = vcmp.eq.f32.partialorder %v32, %v14
    %vm57 = vcmp.gt.s32.totalorder %v24, 0
    %vm58 = vcmp.gt.s32.totalorder %v24, 1
    %vm59 = vcmp.gt.s32.totalorder %v24, 2
    %vm60 = vcmp.gt.s32.totalorder %v24, 3
    %vm61 = vcmp.gt.s32.totalorder %v24, 4
    %vm62 = vcmp.gt.s32.totalorder %v24, 5
    %vm63 = vcmp.gt.s32.totalorder %v24, 6
    %vm64 = vcmp.gt.s32.totalorder %v24, 7
    %vm65 = vmand %vm49, %vm57
    %vm66 = vmand %vm50, %vm58
    %vm67 = vmand %vm51, %vm59
    %vm68 = vmand %vm52, %vm60
    %vm69 = vmand %vm53, %vm61
    %vm70 = vmand %vm54, %vm62
    %vm71 = vmand %vm55, %vm63
    %vm72 = vmand %vm56, %vm64
    %vm73 = vmor %vm41, %vm65
    %vm74 = vmor %vm42, %vm66
    %vm75 = vmor %vm43, %vm67
    %vm76 = vmor %vm44, %vm68
    %vm77 = vmor %vm45, %vm69
    %vm78 = vmor %vm46, %vm70
    %vm79 = vmor %vm47, %vm71
    %vm80 = vmor %vm48, %vm72
    %v81 = vsel %vm73, 1, 0
    %v82 = vsel %vm74, 1, 0
    %v83 = vsel %vm75, 1, 0
    %v84 = vsel %vm76, 1, 0
    %v85 = vsel %vm77, 1, 0
    %v86 = vsel %vm78, 1, 0
    %v87 = vsel %vm79, 1, 0
    %v88 = vsel %vm80, 1, 0
    %vm89 = vcmask 15360
    %v90 = vsel %vm89, %v81, 0
    %v91 = vsel %vm89, %v82, 0
    %v92 = vsel %vm89, %v83, 0
    %v93 = vsel %vm89, %v84, 0
    %v94 = vsel %vm89, %v85, 0
    %v95 = vadd.s32 %v90, %v94
    %v96 = vsel %vm89, %v86, 0
    %v97 = vadd.s32 %v91, %v96
    %v98 = vsel %vm89, %v87, 0
    %v99 = vadd.s32 %v92, %v98
    %v100 = vsel %vm89, %v88, 0
    %v101 = vadd.s32 %v93, %v100
    %v102 = vadd.s32 %v95, %v97
    %v103 = vadd.s32 %v99, %v101
    %v104 = vadd.s32 %v102, %v103
    %v105 = vrot.slane %v104, 1
    %v106 = vrot.slane %v104, 2
    %v107 = vrot.slane %v104, 3
    %v108 = vrot.slane %v104, 4
    %v109 = vrot.slane %v104, 5
    %v110 = vrot.slane %v104, 6
    %v111 = vrot.slane %v104, 7
    %v112 = vperm.slane %v105, 0
    %v113 = vperm.slane %v106, 0
    %v114 = vperm.slane %v107, 0
    %v115 = vperm.slane %v108, 0
    %v116 = vperm.slane %v109, 0
    %v117 = vperm.slane %v110, 0
    %v118 = vperm.slane %v111, 0
    %vm119 = vcmp.eq.s32.totalorder %v112, %v24
    %vm120 = vcmp.eq.s32.totalorder %v113, %v24
    %vm121 = vcmp.eq.s32.totalorder %v114, %v24
    %vm122 = vcmp.eq.s32.totalorder %v115, %v24
    %vm123 = vcmp.eq.s32.totalorder %v116, %v24
    %vm124 = vcmp.eq.s32.totalorder %v117, %v24
    %vm125 = vcmp.eq.s32.totalorder %v118, %v24
    %v126 = vsel %vm119, 1, 0
    %v127 = vsel %vm120, 2, 0
    %v128 = vsel %vm121, 3, 0
    %v129 = vsel %vm122, 4, 0
    %v130 = vsel %vm123, 5, 0
    %v131 = vsel %vm124, 6, 0
    %v132 = vsel %vm125, 7, 0
    %v133 = vsel %vm89, %v126, 0
    %v134 = vsel %vm89, %v127, 0
    %v135 = vsel %vm89, %v128, 0
    %v136 = vsel %vm89, %v129, 0
    %v137 = vsel %vm89, %v130, 0
    %v138 = vadd.s32 %v133, %v137
    %v139 = vsel %vm89, %v131, 0
    %v140 = vadd.s32 %v134, %v139
    %v141 = vsel %vm89, %v132, 0
    %v142 = vadd.s32 %v135, %v141
    %v143 = vadd.s32 %v136, %v138
    %v144 = vadd.s32 %v140, %v142
    %v145 = vadd.s32 %v143, %v144
    %146 = vst.msk [vmem:[%s3] sm:$0xff] %vm89, %v145
    %v147 = vcvt.s32.f32 %v104
    %148 = vxpose.xlu0.b32.start [1/16] %v147, 128
    %149 = vxpose.xlu0.b32.cont [2/16] 0.0, 128
    %150 = vxpose.xlu0.b32.cont [3/16] 0.0, 128
    %151 = vxpose.xlu0.b32.cont [4/16] 0.0, 128
    %152 = vxpose.xlu0.b32.cont [5/16] 0.0, 128
    %153 = vxpose.xlu0.b32.cont [6/16] 0.0, 128
    %154 = vxpose.xlu0.b32.cont [7/16] 0.0, 128
    %155 = vxpose.xlu0.b32.cont [8/16] 0.0, 128
    %156 = vxpose.xlu0.b32.cont [9/16] 0.0, 128
    %157 = vxpose.xlu0.b32.cont [10/16] 0.0, 128
    %158 = vxpose.xlu0.b32.cont [11/16] 0.0, 128
    %159 = vxpose.xlu0.b32.cont [12/16] 0.0, 128
    %160 = vxpose.xlu0.b32.cont [13/16] 0.0, 128
    %161 = vxpose.xlu0.b32.cont [14/16] 0.0, 128
    %162 = vxpose.xlu0.b32.cont [15/16] 0.0, 128
    %163 = vxpose.xlu0.b32.end [16/16] 0.0, 128
    %v164 = vpop.trf.xlu0
    %v165 = vpop.trf.xlu0
    %v166 = vpop.trf.xlu0
    %v167 = vpop.trf.xlu0
    %v168 = vpop.trf.xlu0
    %v169 = vpop.trf.xlu0
    %v170 = vpop.trf.xlu0
    %v171 = vpop.trf.xlu0
    %v172 = vpop.trf.xlu0
    %v173 = vpop.trf.xlu0
    %v174 = vpop.trf.xlu0
    %v175 = vpop.trf.xlu0
    %v176 = vpop.trf.xlu0
    %v177 = vpop.trf.xlu0
    %v178 = vpop.trf.xlu0
    %v179 = vpop.trf.xlu0
    %v180 = vcvt.s32.f32 %v24
    %v182 = vrot.slane %v164, 1
    %v183 = vperm.slane %v164, 0
    %v184 = vperm.slane %v182, 0
    %vm187 = vcmp.eq.f32.partialorder %v183, %v180
    %vm188 = vcmp.eq.f32.partialorder %v184, %v180
    %v189 = vsel %vm187, 1, 0
    %v190 = vsel %vm188, 1, 0
    %v191 = vcvt.s32.f32 %v189
    %v192 = vcvt.s32.f32 %v190
    %v193 = vld [vmem:[%s1] sm:$0xff]
    %vm194 = vcmask 64512
    %v196 = vsel %vm194, %v191, 0
    %v199 = vsel %vm194, %v192, 0
    %201 = vmatpush.msra.mxu0 0.0
    %202 = vmatpush.msra.mxu0 0.0
    %203 = vmatpush.msra.mxu0 0.0
    %204 = vmatpush.msra.mxu0 0.0
    %205 = vmatpush.msra.mxu0 0.0
    %206 = vmatpush.msra.mxu0 0.0
    %207 = vmatpush.msra.mxu0 0.0
    %208 = vmatpush.msra.mxu0 0.0
    %209 = vmatpush.msra.mxu0 0.0
    %210 = vmatpush.msra.mxu0 0.0
    %211 = vmatpush.msra.mxu0 0.0
    %212 = vmatpush.msra.mxu0 0.0
    %213 = vmatpush.msra.mxu0 0.0
    %214 = vmatpush.msra.mxu0 0.0
    %215 = vmatpush.msra.mxu0 0.0
    %216 = vmatpush.msra.mxu0 %v193
    %217 = vmatmul.f32.gmra.mxu0 %v196
    %v218 = vpop.f32.mrf.mxu0
    %v219 = vadd.f32 0.0, %v218
    %220 = vmatmul.f32.gmra.mxu0 %v199
    %v221 = vpop.f32.mrf.mxu0
    %v222 = vadd.f32 0.0, %v221
    %223 = vdwg.mxu0
    %224 = vst [vmem:[#allocation2] sm:$0xff] %v219
    %225 = vst [vmem:[#allocation2 + $0x8] sm:$0xff] %v222
    // Predicated region
    $region10: #{tpu_custom_call.1} parent=1 // pred_check
      _
    $region11: #{tpu_custom_call.1} parent=1 // pred_check_branch
      %227 = sbr.rel (0) target = $region13
    $region12: #{tpu_custom_call.1} parent=1 // pred_region
      %229 = vsyncadd [#allocation3], 0
      %s230 = sshll.u32 [#allocation2], 4
      %s231 = int_to_ptr.vmem [resolvable:$true] %s230
      %s232 = sshll.u32 %s2, 4
      %s233 = int_to_ptr.hbm [resolvable:$true] %s232
      %238 = dma.vmem_to_hbm [thread:$0]  %s231, 256, %s233, [#allocation3], 128, 128, 8
    $region13: #{tpu_custom_call.1} parent=1 // pred_fallthru
      _
    // Predicated region
    $region14: #{tpu_custom_call.1} parent=1 // pred_check
      _
    $region15: #{tpu_custom_call.1} parent=1 // pred_check_branch
      %240 = sbr.rel (0) target = $region17
    $region16: #{tpu_custom_call.1} parent=1 // pred_region
      _
    $region17: #{tpu_custom_call.1} parent=1 // pred_fallthru
      _
    // Predicated region
    $region18: #{tpu_custom_call.1} parent=1 // pred_check
      _
    $region19: #{tpu_custom_call.1} parent=1 // pred_check_branch
      %242 = sbr.rel (0) target = $region21
    $region20: #{tpu_custom_call.1} parent=1 // pred_region
      %244 = dma.done [#allocation3], 256
    $region21: #{tpu_custom_call.1} parent=1 // pred_fallthru
      _
    // Predicated region
    $region22: #{tpu_custom_call.1} parent=1 // pred_check
      _
    $region23: #{tpu_custom_call.1} parent=1 // pred_check_branch
      %246 = sbr.rel (0) target = $region25
    $region24: #{tpu_custom_call.1} parent=1 // pred_region
      _
    $region25: #{tpu_custom_call.1} parent=1 // pred_fallthru
      _
    %247 = vsyncpa [#allocation3], 1

</llo_original>
